<compile_context>
chip_gen: v7x
topology: tpu7x:2x2x1
jax: 0.10.0
libtpu: 0.0.40
codegen_flags: <defaults>
</compile_context>

<pallas_src>
import jax
import jax.numpy as jnp
from jax.experimental import pallas as pl
from jax.experimental.pallas import tpu as pltpu

_LANE = 128  # vreg lane count (last-dim granularity)
_SUB = 8     # vreg sublane count (second-to-last-dim granularity)


def _round_up(n: int, m: int) -> int:
    return ((n + m - 1) // m) * m


def _pad2d(a, rows, cols):
    return jnp.pad(a, ((0, rows - a.shape[0]), (0, cols - a.shape[1])))


def dqn_forward(x, w1, b1, w2, b2, w3, b3, *, tile_b=256,
                compute_dtype=jnp.float32):
    """Fused DQN forward pass via a single pallas_call.

    tile_b: batch tile (pick 128 on v5e, 256 on v6e/v7x); tiny batches are just
            rounded up to the 8-row sublane quantum so the demo wastes nothing.
    compute_dtype: dtype fed to the MXU (pass jnp.bfloat16 for the native MXU
            path at larger sizes; accumulation stays f32 either way).
    """
    batch, d_in = x.shape
    h1, h2, d_out = w1.shape[1], w2.shape[1], w3.shape[1]

    # Lane-pad every feature dim to a multiple of 128 (zero padding is exact:
    # padded rows/cols of the weights are zero, so they contribute nothing).
    dp = _round_up(d_in, _LANE)
    h1p = _round_up(h1, _LANE)
    h2p = _round_up(h2, _LANE)
    op = _round_up(d_out, _LANE)
    wlane = max(h1p, h2p, op)

    # Batch tiling.
    tb = min(tile_b, _round_up(batch, _SUB))
    bp = _round_up(batch, tb)
    n_tiles = bp // tb

    # --- pack all six parameter tensors into ONE lane-dense VMEM buffer -------
    # Row layout (static Python offsets; static ref slices inside the kernel are
    # free):
    #   [o_w1, o_w1+dp)    W1 padded to (dp,  wlane)
    #   [o_b1, o_b1+8)     b1 in row o_b1
    #   [o_w2, o_w2+h1p)   W2 padded to (h1p, wlane)
    #   [o_b2, o_b2+8)     b2 in row o_b2
    #   [o_w3, o_w3+h2p)   W3 padded to (h2p, wlane)
    #   [o_b3, o_b3+8)     b3 in row o_b3
    o_w1 = 0
    o_b1 = o_w1 + dp
    o_w2 = o_b1 + _SUB
    o_b2 = o_w2 + h1p
    o_w3 = o_b2 + _SUB
    o_b3 = o_w3 + h2p
    n_rows = o_b3 + _SUB

    params = jnp.concatenate(
        [
            _pad2d(w1.astype(jnp.float32), dp, wlane),
            _pad2d(b1.reshape(1, -1).astype(jnp.float32), _SUB, wlane),
            _pad2d(w2.astype(jnp.float32), h1p, wlane),
            _pad2d(b2.reshape(1, -1).astype(jnp.float32), _SUB, wlane),
            _pad2d(w3.astype(jnp.float32), h2p, wlane),
            _pad2d(b3.reshape(1, -1).astype(jnp.float32), _SUB, wlane),
        ],
        axis=0,
    )
    x_pad = _pad2d(x.astype(jnp.float32), bp, dp)

    def kernel(x_ref, p_ref, o_ref):
        def mm(a, row_start, n_in, n_out):
            w = p_ref[row_start:row_start + n_in, :n_out]
            return jnp.dot(a.astype(compute_dtype), w.astype(compute_dtype),
                           preferred_element_type=jnp.float32)

        xt = x_ref[...]
        # fc1 + ReLU
        h = mm(xt, o_w1, dp, h1p) + p_ref[o_b1:o_b1 + 1, :h1p]
        h = jnp.maximum(h, 0.0)
        # fc2 + ReLU
        h = mm(h, o_w2, h1p, h2p) + p_ref[o_b2:o_b2 + 1, :h2p]
        h = jnp.maximum(h, 0.0)
        # out (no activation) -- lane-dense (tb, op) store
        y = mm(h, o_w3, h2p, op) + p_ref[o_b3:o_b3 + 1, :op]
        o_ref[...] = y.astype(o_ref.dtype)

    flops = 2 * bp * (dp * h1p + h1p * h2p + h2p * op)
    bytes_accessed = 4 * (x_pad.size + params.size + bp * op)
    cost = pl.CostEstimate(flops=flops, transcendentals=0,
                           bytes_accessed=bytes_accessed)

    out_padded = pl.pallas_call(
        kernel,
        out_shape=jax.ShapeDtypeStruct((bp, op), jnp.float32),
        grid_spec=pltpu.PrefetchScalarGridSpec(
            num_scalar_prefetch=0,
            grid=(n_tiles,),
            in_specs=[
                # activation tile: streamed / double-buffered over the batch grid
                pl.BlockSpec((tb, dp), lambda i: (i, 0),
                             memory_space=pltpu.MemorySpace.VMEM),
                # packed params: constant index_map -> loaded once, resident
                pl.BlockSpec((n_rows, wlane), lambda i: (0, 0),
                             memory_space=pltpu.MemorySpace.VMEM),
            ],
            out_specs=pl.BlockSpec((tb, op), lambda i: (i, 0),
                                   memory_space=pltpu.MemorySpace.VMEM),
        ),
        compiler_params=pltpu.CompilerParams(
            dimension_semantics=("parallel",),   # shard batch tiles across TCs
            vmem_limit_bytes=32 * 1024 * 1024,   # explicit; fits v7x's 64 MiB
        ),
        cost_estimate=cost,
    )(x_pad, params)

    # Strip batch / lane padding.
    return out_padded[:batch, :d_out]


def init_linear_params(key, in_features, out_features):
    """Deterministic init mimicking torch.nn.Linear: U(-1/sqrt(fan_in), +1/sqrt(fan_in)).

    Weight is stored transposed relative to PyTorch, i.e. (in_features, out_features).
    """
    kw, kb = jax.random.split(key)
    bound = 1.0 / jnp.sqrt(jnp.float32(in_features))
    w = jax.random.uniform(kw, (in_features, out_features), jnp.float32,
                           minval=-bound, maxval=bound)
    b = jax.random.uniform(kb, (1, out_features), jnp.float32,
                           minval=-bound, maxval=bound)
    return w, b


if __name__ == "__main__":
    # DQN(n_observed_state=4, layers=(32, 32), action_space_size=2), batch=8.
    batch = 8
    n_observed_state = 4
    layers = (32, 32)
    action_space_size = 2

    key = jax.random.PRNGKey(0)
    kx, k1, k2, k3 = jax.random.split(key, 4)

    x = jax.random.normal(kx, (batch, n_observed_state), jnp.float32)
    w1, b1 = init_linear_params(k1, n_observed_state, layers[0])
    w2, b2 = init_linear_params(k2, layers[0], layers[1])
    w3, b3 = init_linear_params(k3, layers[1], action_space_size)

    out = dqn_forward(x, w1, b1, w2, b2, w3, b3)
    jax.block_until_ready(out)

    # Reference check in plain JAX (same semantics as the PyTorch forward).
    hr = jnp.maximum(x @ w1 + b1, 0.0)
    hr = jnp.maximum(hr @ w2 + b2, 0.0)
    ref = hr @ w3 + b3

    assert out.shape == (batch, action_space_size)
    assert jnp.allclose(out, ref, atol=1e-5, rtol=1e-5), (
        f"max abs err = {float(jnp.max(jnp.abs(out - ref)))}")

    print("KERNEL_OK")
</pallas_src>

<mosaic_0001>
module attributes {stable_mosaic.version = 11 : i64} {
  func.func @kernel(%arg0: i32, %arg1: memref<8x128xf32, #tpu.memory_space<vmem>>, %arg2: memref<408x128xf32, #tpu.memory_space<vmem>>, %arg3: memref<8x128xf32, #tpu.memory_space<vmem>>) attributes {dimension_semantics = [#tpu.dimension_semantics<parallel>], iteration_bounds = array<i64: 1>, scalar_prefetch = 0 : i64, scratch_operands = 0 : i64, tpu.core_type = #tpu.core_type<tc>, window_params = [{transform_indices = @transform_0, window_bounds = array<i64: 8, 128>}, {pipeline_mode = #tpu.pipeline_mode<synchronous>, transform_indices = @transform_1, window_bounds = array<i64: 408, 128>}, {transform_indices = @transform_2, window_bounds = array<i64: 8, 128>}]} {
    %c0 = arith.constant 0 : index
    %c0_0 = arith.constant 0 : index
    %0 = vector.load %arg1[%c0, %c0_0] : memref<8x128xf32, #tpu.memory_space<vmem>>, vector<8x128xf32>
    %c0_1 = arith.constant 0 : index
    %c0_2 = arith.constant 0 : index
    %1 = vector.load %arg2[%c0_1, %c0_2] : memref<408x128xf32, #tpu.memory_space<vmem>>, vector<128x128xf32>
    %cst = arith.constant dense<0.000000e+00> : vector<8x128xf32>
    %2 = tpu.matmul %0, %1, %cst {dimension_numbers = #tpu.dot_dimension_numbers<[1], [0], [0], [1], [0, 0, 1, 1], [], []>} : vector<8x128xf32>, vector<128x128xf32>, vector<8x128xf32> -> vector<8x128xf32>
    %c128 = arith.constant 128 : index
    %c0_3 = arith.constant 0 : index
    %3 = vector.load %arg2[%c128, %c0_3] : memref<408x128xf32, #tpu.memory_space<vmem>>, vector<1x128xf32>
    %4 = vector.broadcast %3 : vector<1x128xf32> to vector<8x128xf32>
    %5 = arith.addf %2, %4 : vector<8x128xf32>
    %cst_4 = arith.constant 0.000000e+00 : f32
    %6 = vector.broadcast %cst_4 : f32 to vector<8x128xf32>
    %7 = arith.maximumf %5, %6 : vector<8x128xf32>
    %c136 = arith.constant 136 : index
    %c0_5 = arith.constant 0 : index
    %8 = vector.load %arg2[%c136, %c0_5] : memref<408x128xf32, #tpu.memory_space<vmem>>, vector<128x128xf32>
    %cst_6 = arith.constant dense<0.000000e+00> : vector<8x128xf32>
    %9 = tpu.matmul %7, %8, %cst_6 {dimension_numbers = #tpu.dot_dimension_numbers<[1], [0], [0], [1], [0, 0, 1, 1], [], []>} : vector<8x128xf32>, vector<128x128xf32>, vector<8x128xf32> -> vector<8x128xf32>
    %c264 = arith.constant 264 : index
    %c0_7 = arith.constant 0 : index
    %10 = vector.load %arg2[%c264, %c0_7] : memref<408x128xf32, #tpu.memory_space<vmem>>, vector<1x128xf32>
    %11 = vector.broadcast %10 : vector<1x128xf32> to vector<8x128xf32>
    %12 = arith.addf %9, %11 : vector<8x128xf32>
    %cst_8 = arith.constant 0.000000e+00 : f32
    %13 = vector.broadcast %cst_8 : f32 to vector<8x128xf32>
    %14 = arith.maximumf %12, %13 : vector<8x128xf32>
    %c272 = arith.constant 272 : index
    %c0_9 = arith.constant 0 : index
    %15 = vector.load %arg2[%c272, %c0_9] : memref<408x128xf32, #tpu.memory_space<vmem>>, vector<128x128xf32>
    %cst_10 = arith.constant dense<0.000000e+00> : vector<8x128xf32>
    %16 = tpu.matmul %14, %15, %cst_10 {dimension_numbers = #tpu.dot_dimension_numbers<[1], [0], [0], [1], [0, 0, 1, 1], [], []>} : vector<8x128xf32>, vector<128x128xf32>, vector<8x128xf32> -> vector<8x128xf32>
    %c400 = arith.constant 400 : index
    %c0_11 = arith.constant 0 : index
    %17 = vector.load %arg2[%c400, %c0_11] : memref<408x128xf32, #tpu.memory_space<vmem>>, vector<1x128xf32>
    %18 = vector.broadcast %17 : vector<1x128xf32> to vector<8x128xf32>
    %19 = arith.addf %16, %18 : vector<8x128xf32>
    %c0_12 = arith.constant 0 : index
    %c0_13 = arith.constant 0 : index
    %20 = vector.load %arg3[%c0_12, %c0_13] : memref<8x128xf32, #tpu.memory_space<vmem>>, vector<8x128xf32>
    tpu.vector_store %arg3[%c0_12, %c0_13], %19 {strides = array<i32>} : memref<8x128xf32, #tpu.memory_space<vmem>>, vector<8x128xf32>,
    return
  }
  func.func @transform_0(%arg0: i32) -> (i32, i32) {
    %c0_i32 = arith.constant 0 : i32
    %c0_i32_0 = arith.constant 0 : i32
    return %arg0, %c0_i32 : i32, i32
  }
  func.func @transform_1(%arg0: i32) -> (i32, i32) {
    %c0_i32 = arith.constant 0 : i32
    %c0_i32_0 = arith.constant 0 : i32
    %c0_i32_1 = arith.constant 0 : i32
    return %c0_i32, %c0_i32_0 : i32, i32
  }
  func.func @transform_2(%arg0: i32) -> (i32, i32) {
    %c0_i32 = arith.constant 0 : i32
    %c0_i32_0 = arith.constant 0 : i32
    return %arg0, %c0_i32 : i32, i32
  }
}

</mosaic_0001>

<llo_original>
// kernel: tpu_custom_call.1
$region0: #{tpu_custom_call.1}
  #allocation0 [shape = 'u32[]', space=smem, size = 0x4, offset = 0x4, fixed_abs, tag = 'smem constant byte address 0x4 - core index']
  #allocation1 [shape = 'u32[144,128]{1,0:T(1,128)}', space=vmem, size = 0x12000, scoped, tag = 'internal scratch']
  %s0 = inlined_call_operand.hbm [shape: f32[8,128], index: 0, kind: input, shape index: {}]
  %s1 = inlined_call_operand.hbm [shape: f32[408,128], index: 1, kind: input, shape index: {}]
  %s2 = inlined_call_operand.hbm [shape: f32[8,128], index: 2, kind: output, shape index: {}]
  %s3 = sld [smem:[#allocation0]]
  $region26: #{tpu_custom_call.1} parent=0
    _
  %s5 = ssub.s32 1, %s3
  %s6 = scalar_select 0, %s5, %s3
  $region1: #{tpu_custom_call.1} parent=0
    #allocation2 [shape = 'u8[4096]{0}', space=vmem, size = 0x1000, scoped, tag = 'input window, operand 0, single buffered']
    #allocation3 [shape = 's32[1]{0}', space=sflag, size = 0x4, scoped, tag = 'scoped memory for tpu_custom_call.1']
    #allocation4 [shape = 's32[1]{0}', space=sflag, size = 0x4, scoped, tag = 'scoped memory for tpu_custom_call.1']
    #allocation5 [shape = 'u8[208896]{0}', space=vmem, size = 0x33000, scoped, tag = 'input window, operand 1, single buffered']
    #allocation6 [shape = 's32[1]{0}', space=sflag, size = 0x4, scoped, tag = 'scoped memory for tpu_custom_call.1']
    #allocation7 [shape = 'u8[4096]{0}', space=vmem, size = 0x1000, scoped, tag = 'output window, operand 0, single buffered']
    %7 = vsyncpa [#allocation3], 0
    %8 = vsyncpa [#allocation6], 0
    %9 = vsyncpa [#allocation4], 0
    // Predicated region
    $region2: #{tpu_custom_call.1} parent=1 // pred_check
      _
    $region3: #{tpu_custom_call.1} parent=1 // pred_check_branch
      %11 = sbr.rel (0) target = $region5
    $region4: #{tpu_custom_call.1} parent=1 // pred_region
      %s13 = ssub.s32 128, 128
      %14 = vsyncadd [#allocation3], %s13
      %s16 = sshll.u32 [#allocation2], 4
      %s17 = int_to_ptr.vmem [resolvable:$true] %s16
      %19 = dma.hbm_to_vmem [thread:$0]  %s0, 128, %s17, [#allocation3]
    $region5: #{tpu_custom_call.1} parent=1 // pred_fallthru
      _
    // Predicated region
    $region6: #{tpu_custom_call.1} parent=1 // pred_check
      _
    $region7: #{tpu_custom_call.1} parent=1 // pred_check_branch
      %21 = sbr.rel (0) target = $region9
    $region8: #{tpu_custom_call.1} parent=1 // pred_region
      %s23 = ssub.s32 6528, 6528
      %24 = vsyncadd [#allocation6], %s23
      %s25 = sshll.u32 [#allocation5], 4
      %s26 = int_to_ptr.vmem [resolvable:$true] %s25
      %31 = dma.hbm_to_vmem [thread:$0]  %s1, 6528, %s26, [#allocation6], 128, 128, 8
    $region9: #{tpu_custom_call.1} parent=1 // pred_fallthru
      _
    // Predicated region
    $region10: #{tpu_custom_call.1} parent=1 // pred_check
      _
    $region11: #{tpu_custom_call.1} parent=1 // pred_check_branch
      %33 = sbr.rel (0) target = $region13
    $region12: #{tpu_custom_call.1} parent=1 // pred_region
      %34 = dma.done [#allocation3], 128
    $region13: #{tpu_custom_call.1} parent=1 // pred_fallthru
      _
    // Predicated region
    $region14: #{tpu_custom_call.1} parent=1 // pred_check
      _
    $region15: #{tpu_custom_call.1} parent=1 // pred_check_branch
      %36 = sbr.rel (0) target = $region17
    $region16: #{tpu_custom_call.1} parent=1 // pred_region
      %37 = dma.done [#allocation6], 6528
    $region17: #{tpu_custom_call.1} parent=1 // pred_fallthru
      _
    %v38 = vld [vmem:[#allocation2] sm:$0xff]
    %v39 = vld [vmem:[#allocation5] sm:$0xff]
    %v40 = vld [vmem:[#allocation5 + $0x8] sm:$0xff]
    %v41 = vld [vmem:[#allocation5 + $0x10] sm:$0xff]
    %v42 = vld [vmem:[#allocation5 + $0x18] sm:$0xff]
    %v43 = vld [vmem:[#allocation5 + $0x20] sm:$0xff]
    %v44 = vld [vmem:[#allocation5 + $0x28] sm:$0xff]
    %v45 = vld [vmem:[#allocation5 + $0x30] sm:$0xff]
    %v46 = vld [vmem:[#allocation5 + $0x38] sm:$0xff]
    %v47 = vld [vmem:[#allocation5 + $0x40] sm:$0xff]
    %v48 = vld [vmem:[#allocation5 + $0x48] sm:$0xff]
    %v49 = vld [vmem:[#allocation5 + $0x50] sm:$0xff]
    %v50 = vld [vmem:[#allocation5 + $0x58] sm:$0xff]
    %v51 = vld [vmem:[#allocation5 + $0x60] sm:$0xff]
    %v52 = vld [vmem:[#allocation5 + $0x68] sm:$0xff]
    %v53 = vld [vmem:[#allocation5 + $0x70] sm:$0xff]
    %v54 = vld [vmem:[#allocation5 + $0x78] sm:$0xff]
    %v55 = vld [vmem:[#allocation5 + $0x80] sm:$0x1]
    %v56 = vlaneseq
    %v57 = vshrl.u32 %v56, 7
    %v58 = vsub.s32 0, %v57
    %v59 = vrot.slane %v55, %v58
    %60 = vmatprep.subr.mxu0 0.0
    %61 = vmatpush1.msra.mxu0 %v39
    %62 = vmatprep.subr.mxu0 0.0
    %63 = vmatpush1.msra.mxu0 %v40
    %64 = vmatprep.subr.mxu0 0.0
    %65 = vmatpush1.msra.mxu0 %v41
    %66 = vmatprep.subr.mxu0 0.0
    %67 = vmatpush1.msra.mxu0 %v42
    %68 = vmatprep.subr.mxu0 0.0
    %69 = vmatpush1.msra.mxu0 %v43
    %70 = vmatprep.subr.mxu0 0.0
    %71 = vmatpush1.msra.mxu0 %v44
    %72 = vmatprep.subr.mxu0 0.0
    %73 = vmatpush1.msra.mxu0 %v45
    %74 = vmatprep.subr.mxu0 0.0
    %75 = vmatpush1.msra.mxu0 %v46
    %76 = vmatprep.subr.mxu0 0.0
    %77 = vmatpush1.msra.mxu0 %v47
    %78 = vmatprep.subr.mxu0 0.0
    %79 = vmatpush1.msra.mxu0 %v48
    %80 = vmatprep.subr.mxu0 0.0
    %81 = vmatpush1.msra.mxu0 %v49
    %82 = vmatprep.subr.mxu0 0.0
    %83 = vmatpush1.msra.mxu0 %v50
    %84 = vmatprep.subr.mxu0 0.0
    %85 = vmatpush1.msra.mxu0 %v51
    %86 = vmatprep.subr.mxu0 0.0
    %87 = vmatpush1.msra.mxu0 %v52
    %88 = vmatprep.subr.mxu0 0.0
    %89 = vmatpush1.msra.mxu0 %v53
    %90 = vmatprep.subr.mxu0 0.0
    %91 = vmatpush1.msra.mxu0 %v54
    %92 = vmatprep.subr.mxu0 0.0
    %93 = vmatpush1.msra.mxu0 0.0
    %94 = vmatprep.subr.mxu0 0.0
    %95 = vmatpush1.msra.mxu0 0.0
    %96 = vmatprep.subr.mxu0 0.0
    %97 = vmatpush1.msra.mxu0 0.0
    %98 = vmatprep.subr.mxu0 0.0
    %99 = vmatpush1.msra.mxu0 0.0
    %100 = vmatprep.subr.mxu0 0.0
    %101 = vmatpush1.msra.mxu0 0.0
    %102 = vmatprep.subr.mxu0 0.0
    %103 = vmatpush1.msra.mxu0 0.0
    %104 = vmatprep.subr.mxu0 0.0
    %105 = vmatpush1.msra.mxu0 0.0
    %106 = vmatprep.subr.mxu0 0.0
    %107 = vmatpush1.msra.mxu0 0.0
    %108 = vmatprep.subr.mxu0 0.0
    %109 = vmatpush1.msra.mxu0 0.0
    %110 = vmatprep.subr.mxu0 0.0
    %111 = vmatpush1.msra.mxu0 0.0
    %112 = vmatprep.subr.mxu0 0.0
    %113 = vmatpush1.msra.mxu0 0.0
    %114 = vmatprep.subr.mxu0 0.0
    %115 = vmatpush1.msra.mxu0 0.0
    %116 = vmatprep.subr.mxu0 0.0
    %117 = vmatpush1.msra.mxu0 0.0
    %118 = vmatprep.subr.mxu0 0.0
    %119 = vmatpush1.msra.mxu0 0.0
    %120 = vmatprep.subr.mxu0 0.0
    %121 = vmatpush1.msra.mxu0 0.0
    %122 = vmatprep.subr.mxu0 0.0
    %123 = vmatpush1.msra.mxu0 0.0
    %124 = vmatprep.mubr.f32.mxu0 0.0
    %125 = vmatmul.mubr.f32.gmra.mrb[0].mxu0 %v38
    %v126 = vpop.f32.mrb[0].mxu0
    %v127 = vadd.f32 %v59, %v126
    %v128 = vpop.f32.mrb[0].mxu0
    %129 = vdwg.mxu0
    %v130 = vmax.f32 %v127, 0.0
    %v131 = vld [vmem:[#allocation5 + $0x88] sm:$0xff]
    %v132 = vld [vmem:[#allocation5 + $0x90] sm:$0xff]
    %v133 = vld [vmem:[#allocation5 + $0x98] sm:$0xff]
    %v134 = vld [vmem:[#allocation5 + $0xa0] sm:$0xff]
    %v135 = vld [vmem:[#allocation5 + $0xa8] sm:$0xff]
    %v136 = vld [vmem:[#allocation5 + $0xb0] sm:$0xff]
    %v137 = vld [vmem:[#allocation5 + $0xb8] sm:$0xff]
    %v138 = vld [vmem:[#allocation5 + $0xc0] sm:$0xff]
    %v139 = vld [vmem:[#allocation5 + $0xc8] sm:$0xff]
    %v140 = vld [vmem:[#allocation5 + $0xd0] sm:$0xff]
    %v141 = vld [vmem:[#allocation5 + $0xd8] sm:$0xff]
    %v142 = vld [vmem:[#allocation5 + $0xe0] sm:$0xff]
    %v143 = vld [vmem:[#allocation5 + $0xe8] sm:$0xff]
    %v144 = vld [vmem:[#allocation5 + $0xf0] sm:$0xff]
    %v145 = vld [vmem:[#allocation5 + $0xf8] sm:$0xff]
    %v146 = vld [vmem:[#allocation5 + $0x100] sm:$0xff]
    %v147 = vld [vmem:[#allocation5 + $0x108] sm:$0x1]
    %v148 = vlaneseq
    %v149 = vshrl.u32 %v148, 7
    %v150 = vsub.s32 0, %v149
    %v151 = vrot.slane %v147, %v150
    %152 = vmatprep.subr.mxu0 0.0
    %153 = vmatpush1.msra.mxu0 %v131
    %154 = vmatprep.subr.mxu0 0.0
    %155 = vmatpush1.msra.mxu0 %v132
    %156 = vmatprep.subr.mxu0 0.0
    %157 = vmatpush1.msra.mxu0 %v133
    %158 = vmatprep.subr.mxu0 0.0
    %159 = vmatpush1.msra.mxu0 %v134
    %160 = vmatprep.subr.mxu0 0.0
    %161 = vmatpush1.msra.mxu0 %v135
    %162 = vmatprep.subr.mxu0 0.0
    %163 = vmatpush1.msra.mxu0 %v136
    %164 = vmatprep.subr.mxu0 0.0
    %165 = vmatpush1.msra.mxu0 %v137
    %166 = vmatprep.subr.mxu0 0.0
    %167 = vmatpush1.msra.mxu0 %v138
    %168 = vmatprep.subr.mxu0 0.0
    %169 = vmatpush1.msra.mxu0 %v139
    %170 = vmatprep.subr.mxu0 0.0
    %171 = vmatpush1.msra.mxu0 %v140
    %172 = vmatprep.subr.mxu0 0.0
    %173 = vmatpush1.msra.mxu0 %v141
    %174 = vmatprep.subr.mxu0 0.0
    %175 = vmatpush1.msra.mxu0 %v142
    %176 = vmatprep.subr.mxu0 0.0
    %177 = vmatpush1.msra.mxu0 %v143
    %178 = vmatprep.subr.mxu0 0.0
    %179 = vmatpush1.msra.mxu0 %v144
    %180 = vmatprep.subr.mxu0 0.0
    %181 = vmatpush1.msra.mxu0 %v145
    %182 = vmatprep.subr.mxu0 0.0
    %183 = vmatpush1.msra.mxu0 %v146
    %184 = vmatprep.subr.mxu0 0.0
    %185 = vmatpush1.msra.mxu0 0.0
    %186 = vmatprep.subr.mxu0 0.0
    %187 = vmatpush1.msra.mxu0 0.0
    %188 = vmatprep.subr.mxu0 0.0
    %189 = vmatpush1.msra.mxu0 0.0
    %190 = vmatprep.subr.mxu0 0.0
    %191 = vmatpush1.msra.mxu0 0.0
    %192 = vmatprep.subr.mxu0 0.0
    %193 = vmatpush1.msra.mxu0 0.0
    %194 = vmatprep.subr.mxu0 0.0
    %195 = vmatpush1.msra.mxu0 0.0
    %196 = vmatprep.subr.mxu0 0.0
    %197 = vmatpush1.msra.mxu0 0.0
    %198 = vmatprep.subr.mxu0 0.0
    %199 = vmatpush1.msra.mxu0 0.0
    %200 = vmatprep.subr.mxu0 0.0
    %201 = vmatpush1.msra.mxu0 0.0
    %202 = vmatprep.subr.mxu0 0.0
    %203 = vmatpush1.msra.mxu0 0.0
    %204 = vmatprep.subr.mxu0 0.0
    %205 = vmatpush1.msra.mxu0 0.0
    %206 = vmatprep.subr.mxu0 0.0
    %207 = vmatpush1.msra.mxu0 0.0
    %208 = vmatprep.subr.mxu0 0.0
    %209 = vmatpush1.msra.mxu0 0.0
    %210 = vmatprep.subr.mxu0 0.0
    %211 = vmatpush1.msra.mxu0 0.0
    %212 = vmatprep.subr.mxu0 0.0
    %213 = vmatpush1.msra.mxu0 0.0
    %214 = vmatprep.subr.mxu0 0.0
    %215 = vmatpush1.msra.mxu0 0.0
    %216 = vmatprep.mubr.f32.mxu0 0.0
    %217 = vmatmul.mubr.f32.gmra.mrb[0].mxu0 %v130
    %v218 = vpop.f32.mrb[0].mxu0
    %v219 = vadd.f32 %v151, %v218
    %v220 = vpop.f32.mrb[0].mxu0
    %221 = vdwg.mxu0
    %v222 = vmax.f32 %v219, 0.0
    %v223 = vld [vmem:[#allocation5 + $0x110] sm:$0xff]
    %v224 = vld [vmem:[#allocation5 + $0x118] sm:$0xff]
    %v225 = vld [vmem:[#allocation5 + $0x120] sm:$0xff]
    %v226 = vld [vmem:[#allocation5 + $0x128] sm:$0xff]
    %v227 = vld [vmem:[#allocation5 + $0x130] sm:$0xff]
    %v228 = vld [vmem:[#allocation5 + $0x138] sm:$0xff]
    %v229 = vld [vmem:[#allocation5 + $0x140] sm:$0xff]
    %v230 = vld [vmem:[#allocation5 + $0x148] sm:$0xff]
    %v231 = vld [vmem:[#allocation5 + $0x150] sm:$0xff]
    %v232 = vld [vmem:[#allocation5 + $0x158] sm:$0xff]
    %v233 = vld [vmem:[#allocation5 + $0x160] sm:$0xff]
    %v234 = vld [vmem:[#allocation5 + $0x168] sm:$0xff]
    %v235 = vld [vmem:[#allocation5 + $0x170] sm:$0xff]
    %v236 = vld [vmem:[#allocation5 + $0x178] sm:$0xff]
    %v237 = vld [vmem:[#allocation5 + $0x180] sm:$0xff]
    %v238 = vld [vmem:[#allocation5 + $0x188] sm:$0xff]
    %v239 = vld [vmem:[#allocation5 + $0x190] sm:$0x1]
    %v240 = vlaneseq
    %v241 = vshrl.u32 %v240, 7
    %v242 = vsub.s32 0, %v241
    %v243 = vrot.slane %v239, %v242
    %244 = vmatprep.subr.mxu0 0.0
    %245 = vmatpush1.msra.mxu0 %v223
    %246 = vmatprep.subr.mxu0 0.0
    %247 = vmatpush1.msra.mxu0 %v224
    %248 = vmatprep.subr.mxu0 0.0
    %249 = vmatpush1.msra.mxu0 %v225
    %250 = vmatprep.subr.mxu0 0.0
    %251 = vmatpush1.msra.mxu0 %v226
    %252 = vmatprep.subr.mxu0 0.0
    %253 = vmatpush1.msra.mxu0 %v227
    %254 = vmatprep.subr.mxu0 0.0
    %255 = vmatpush1.msra.mxu0 %v228
    %256 = vmatprep.subr.mxu0 0.0
    %257 = vmatpush1.msra.mxu0 %v229
    %258 = vmatprep.subr.mxu0 0.0
    %259 = vmatpush1.msra.mxu0 %v230
    %260 = vmatprep.subr.mxu0 0.0
    %261 = vmatpush1.msra.mxu0 %v231
    %262 = vmatprep.subr.mxu0 0.0
    %263 = vmatpush1.msra.mxu0 %v232
    %264 = vmatprep.subr.mxu0 0.0
    %265 = vmatpush1.msra.mxu0 %v233
    %266 = vmatprep.subr.mxu0 0.0
    %267 = vmatpush1.msra.mxu0 %v234
    %268 = vmatprep.subr.mxu0 0.0
    %269 = vmatpush1.msra.mxu0 %v235
    %270 = vmatprep.subr.mxu0 0.0
    %271 = vmatpush1.msra.mxu0 %v236
    %272 = vmatprep.subr.mxu0 0.0
    %273 = vmatpush1.msra.mxu0 %v237
    %274 = vmatprep.subr.mxu0 0.0
    %275 = vmatpush1.msra.mxu0 %v238
    %276 = vmatprep.subr.mxu0 0.0
    %277 = vmatpush1.msra.mxu0 0.0
    %278 = vmatprep.subr.mxu0 0.0
    %279 = vmatpush1.msra.mxu0 0.0
    %280 = vmatprep.subr.mxu0 0.0
    %281 = vmatpush1.msra.mxu0 0.0
    %282 = vmatprep.subr.mxu0 0.0
    %283 = vmatpush1.msra.mxu0 0.0
    %284 = vmatprep.subr.mxu0 0.0
    %285 = vmatpush1.msra.mxu0 0.0
    %286 = vmatprep.subr.mxu0 0.0
    %287 = vmatpush1.msra.mxu0 0.0
    %288 = vmatprep.subr.mxu0 0.0
    %289 = vmatpush1.msra.mxu0 0.0
    %290 = vmatprep.subr.mxu0 0.0
    %291 = vmatpush1.msra.mxu0 0.0
    %292 = vmatprep.subr.mxu0 0.0
    %293 = vmatpush1.msra.mxu0 0.0
    %294 = vmatprep.subr.mxu0 0.0
    %295 = vmatpush1.msra.mxu0 0.0
    %296 = vmatprep.subr.mxu0 0.0
    %297 = vmatpush1.msra.mxu0 0.0
    %298 = vmatprep.subr.mxu0 0.0
    %299 = vmatpush1.msra.mxu0 0.0
    %300 = vmatprep.subr.mxu0 0.0
    %301 = vmatpush1.msra.mxu0 0.0
    %302 = vmatprep.subr.mxu0 0.0
    %303 = vmatpush1.msra.mxu0 0.0
    %304 = vmatprep.subr.mxu0 0.0
    %305 = vmatpush1.msra.mxu0 0.0
    %306 = vmatprep.subr.mxu0 0.0
    %307 = vmatpush1.msra.mxu0 0.0
    %308 = vmatprep.mubr.f32.mxu0 0.0
    %309 = vmatmul.mubr.f32.gmra.mrb[0].mxu0 %v222
    %v310 = vpop.f32.mrb[0].mxu0
    %v311 = vadd.f32 %v243, %v310
    %v312 = vpop.f32.mrb[0].mxu0
    %313 = vdwg.mxu0
    %314 = vst [vmem:[#allocation7] sm:$0xff] %v311
    // Predicated region
    $region18: #{tpu_custom_call.1} parent=1 // pred_check
      _
    $region19: #{tpu_custom_call.1} parent=1 // pred_check_branch
      %316 = sbr.rel (0) target = $region21
    $region20: #{tpu_custom_call.1} parent=1 // pred_region
      %s318 = ssub.s32 128, 128
      %319 = vsyncadd [#allocation4], %s318
      %s321 = sshll.u32 [#allocation7], 4
      %s322 = int_to_ptr.vmem [resolvable:$true] %s321
      %324 = dma.vmem_to_hbm [thread:$0]  %s322, 128, %s2, [#allocation4]
    $region21: #{tpu_custom_call.1} parent=1 // pred_fallthru
      _
    // Predicated region
    $region22: #{tpu_custom_call.1} parent=1 // pred_check
      _
    $region23: #{tpu_custom_call.1} parent=1 // pred_check_branch
      %326 = sbr.rel (0) target = $region25
    $region24: #{tpu_custom_call.1} parent=1 // pred_region
      %327 = dma.done [#allocation4], 128
    $region25: #{tpu_custom_call.1} parent=1 // pred_fallthru
      _
    %328 = vsyncpa [#allocation3], 1
    %329 = vsyncpa [#allocation6], 1
    %330 = vsyncpa [#allocation4], 1

</llo_original>
